<compile_context>
chip_gen: v5e
topology: v5e:2x2
jax: 0.10.0
libtpu: 0.0.40
codegen_flags: <defaults>
</compile_context>

<pallas_src>
import jax
import jax.numpy as jnp
from jax.experimental import pallas as pl
from jax.experimental.pallas import tpu as pltpu


def _cnn_kernel(x_ref, cw_ref, cb_ref, lw_ref, lb_ref, o_ref):
    # x_ref:  (TB, W, Z)  input tile (native PyTorch layout, no wrapper transpose)
    # cw_ref: (K, W)      conv weight (Conv2d(1,K,(W,1)).weight squeezed), native layout
    # cb_ref: (K, 1)      conv bias as a column -> broadcasts over the Z lane axis
    # lw_ref: (2, K)      linear weight, native (out, in) layout
    # lb_ref: (2, 1)      linear bias as a column
    # o_ref:  (TB, 2, Z)  output tile, Z on the lane axis (wrapper transposes to (B, Z, 2))
    cw = cw_ref[...]
    cb = cb_ref[...]
    lw = lw_ref[...]
    lb = lb_ref[...]
    tb = x_ref.shape[0]
    # Static unroll over the batch tile: two small MXU matmuls per element, Z stays on
    # the lane axis throughout -> no in-kernel transposes or tile-crossing reshapes.
    for b in range(tb):
        xb = x_ref[b]                                                    # (W, Z)
        h = jnp.dot(cw, xb, preferred_element_type=jnp.float32) + cb     # (K, Z)
        h = jnp.maximum(h, 0.0)                                          # ReLU
        # AdaptiveMaxPool2d((1, Z)) is identity here (spatial dims already (1, Z)).
        # Dropout layers are identity in eval mode.
        y = jnp.dot(lw, h, preferred_element_type=jnp.float32) + lb      # (2, Z)
        o_ref[b] = jnp.tanh(y).astype(o_ref.dtype)


def model_forward(x_bwz, conv_w, conv_b, lin_w, lin_b, *, batch_tile=None):
    """x_bwz: (B, W, Z) float32 (equivalent to PyTorch's x.view(-1, 1, W, Z) squeezed).
    conv_w: (K, W)  (Conv2d(1,K,(W,1)).weight squeezed)
    conv_b: (K,)
    lin_w:  (2, K)  (Linear(K,2).weight)
    lin_b:  (2,)
    returns (B, Z, 2), matching the PyTorch output exactly.
    """
    B, W, Z = x_bwz.shape
    K = conv_w.shape[0]

    if batch_tile is None:
        # Small B: whole problem in a single grid step (it is only a few KB of VMEM).
        # Large B: fuse many batch elements per step to amortize per-step overhead.
        if B <= 16:
            batch_tile = B
        else:
            batch_tile = next(t for t in (16, 8, 4, 2, 1) if B % t == 0)
    assert B % batch_tile == 0, "batch_tile must divide B"

    x = x_bwz.astype(jnp.float32)                    # consumed directly, no transpose
    cw = conv_w.astype(jnp.float32)                  # (K, W)
    cb = conv_b.reshape(K, 1).astype(jnp.float32)    # (K, 1)
    lw = lin_w.astype(jnp.float32)                   # (2, K)
    lb = lin_b.reshape(2, 1).astype(jnp.float32)     # (2, 1)

    grid_spec = pltpu.PrefetchScalarGridSpec(
        num_scalar_prefetch=0,
        grid=(B // batch_tile,),
        in_specs=[
            pl.BlockSpec((batch_tile, W, Z), lambda i: (i, 0, 0)),
            pl.BlockSpec((K, W), lambda i: (0, 0)),   # weights stay resident
            pl.BlockSpec((K, 1), lambda i: (0, 0)),
            pl.BlockSpec((2, K), lambda i: (0, 0)),
            pl.BlockSpec((2, 1), lambda i: (0, 0)),
        ],
        out_specs=pl.BlockSpec((batch_tile, 2, Z), lambda i: (i, 0, 0)),
    )

    out_b2z = pl.pallas_call(
        _cnn_kernel,
        out_shape=jax.ShapeDtypeStruct((B, 2, Z), jnp.float32),
        grid_spec=grid_spec,
        compiler_params=pltpu.CompilerParams(
            dimension_semantics=("parallel",)),
    )(x, cw, cb, lw, lb)

    # Tiny layout fix-up (B*Z*2 elements) back to PyTorch's (B, Z, 2) output.
    return jnp.transpose(out_b2z, (0, 2, 1))


def _reference_forward(x_bwz, conv_w, conv_b, lin_w, lin_b):
    # Pure-JAX reference of the PyTorch forward (eval mode).
    h = jnp.einsum("bwz,kw->bkz", x_bwz, conv_w) + conv_b[None, :, None]  # (B,K,Z)
    h = jnp.maximum(h, 0.0)
    h = jnp.transpose(h, (0, 2, 1))                                        # (B,Z,K)
    y = jnp.einsum("bzk,ok->bzo", h, lin_w) + lin_b[None, None, :]         # (B,Z,2)
    return jnp.tanh(y)


if __name__ == "__main__":
    # Small deterministic shapes consistent with the module defaults
    # (window=32, n_zone=20, n_kernels=32), batch=2.
    B, W, Z, K = 2, 32, 20, 32

    key = jax.random.PRNGKey(0)
    kx, kcw, kcb, klw, klb = jax.random.split(key, 5)

    x = jax.random.normal(kx, (B, W, Z), dtype=jnp.float32)
    conv_w = 0.1 * jax.random.normal(kcw, (K, W), dtype=jnp.float32)
    conv_b = 0.1 * jax.random.normal(kcb, (K,), dtype=jnp.float32)
    lin_w = 0.1 * jax.random.normal(klw, (2, K), dtype=jnp.float32)
    lin_b = 0.1 * jax.random.normal(klb, (2,), dtype=jnp.float32)

    out = model_forward(x, conv_w, conv_b, lin_w, lin_b)
    out = jax.block_until_ready(out)

    ref = _reference_forward(x, conv_w, conv_b, lin_w, lin_b)
    assert out.shape == (B, Z, 2)
    assert jnp.allclose(out, ref, atol=1e-5, rtol=1e-5)

    print("KERNEL_OK")
</pallas_src>

<mosaic_0001>
module attributes {stable_mosaic.version = 11 : i64} {
  func.func @_cnn_kernel(%arg0: i32, %arg1: memref<2x32x20xf32, #tpu.memory_space<vmem>>, %arg2: memref<32x32xf32, #tpu.memory_space<vmem>>, %arg3: memref<32x1xf32, #tpu.memory_space<vmem>>, %arg4: memref<2x32xf32, #tpu.memory_space<vmem>>, %arg5: memref<2x1xf32, #tpu.memory_space<vmem>>, %arg6: memref<2x2x20xf32, #tpu.memory_space<vmem>>) attributes {dimension_semantics = [#tpu.dimension_semantics<parallel>], iteration_bounds = array<i64: 1>, scalar_prefetch = 0 : i64, scratch_operands = 0 : i64, tpu.core_type = #tpu.core_type<tc>, window_params = [{transform_indices = @transform_0, window_bounds = array<i64: 2, 32, 20>}, {pipeline_mode = #tpu.pipeline_mode<synchronous>, transform_indices = @transform_1, window_bounds = array<i64: 32, 32>}, {pipeline_mode = #tpu.pipeline_mode<synchronous>, transform_indices = @transform_2, window_bounds = array<i64: 32, 1>}, {pipeline_mode = #tpu.pipeline_mode<synchronous>, transform_indices = @transform_3, window_bounds = array<i64: 2, 32>}, {pipeline_mode = #tpu.pipeline_mode<synchronous>, transform_indices = @transform_4, window_bounds = array<i64: 2, 1>}, {transform_indices = @transform_5, window_bounds = array<i64: 2, 2, 20>}]} {
    %c0 = arith.constant 0 : index
    %c0_0 = arith.constant 0 : index
    %0 = vector.load %arg2[%c0, %c0_0] : memref<32x32xf32, #tpu.memory_space<vmem>>, vector<32x32xf32>
    %c0_1 = arith.constant 0 : index
    %c0_2 = arith.constant 0 : index
    %1 = vector.load %arg3[%c0_1, %c0_2] : memref<32x1xf32, #tpu.memory_space<vmem>>, vector<32x1xf32>
    %c0_3 = arith.constant 0 : index
    %c0_4 = arith.constant 0 : index
    %2 = vector.load %arg4[%c0_3, %c0_4] : memref<2x32xf32, #tpu.memory_space<vmem>>, vector<2x32xf32>
    %c0_5 = arith.constant 0 : index
    %c0_6 = arith.constant 0 : index
    %3 = vector.load %arg5[%c0_5, %c0_6] : memref<2x1xf32, #tpu.memory_space<vmem>>, vector<2x1xf32>
    %c0_7 = arith.constant 0 : index
    %c0_8 = arith.constant 0 : index
    %c0_9 = arith.constant 0 : index
    %4 = vector.load %arg1[%c0_7, %c0_8, %c0_9] : memref<2x32x20xf32, #tpu.memory_space<vmem>>, vector<1x32x20xf32>
    %5 = vector.shape_cast %4 : vector<1x32x20xf32> to vector<32x20xf32>
    %cst = arith.constant dense<0.000000e+00> : vector<32x20xf32>
    %6 = tpu.matmul %0, %5, %cst {dimension_numbers = #tpu.dot_dimension_numbers<[1], [0], [0], [1], [0, 0, 1, 1], [], []>} : vector<32x32xf32>, vector<32x20xf32>, vector<32x20xf32> -> vector<32x20xf32>
    %7 = vector.broadcast %1 : vector<32x1xf32> to vector<32x20xf32>
    %8 = arith.addf %6, %7 : vector<32x20xf32>
    %cst_10 = arith.constant 0.000000e+00 : f32
    %9 = vector.broadcast %cst_10 : f32 to vector<32x20xf32>
    %10 = arith.maximumf %8, %9 : vector<32x20xf32>
    %cst_11 = arith.constant dense<0.000000e+00> : vector<2x20xf32>
    %11 = tpu.matmul %2, %10, %cst_11 {dimension_numbers = #tpu.dot_dimension_numbers<[1], [0], [0], [1], [0, 0, 1, 1], [], []>} : vector<2x32xf32>, vector<32x20xf32>, vector<2x20xf32> -> vector<2x20xf32>
    %12 = vector.broadcast %3 : vector<2x1xf32> to vector<2x20xf32>
    %13 = arith.addf %11, %12 : vector<2x20xf32>
    %14 = math.tanh %13 : vector<2x20xf32>
    %c0_12 = arith.constant 0 : index
    %c0_13 = arith.constant 0 : index
    %c0_14 = arith.constant 0 : index
    %15 = vector.load %arg6[%c0_12, %c0_13, %c0_14] : memref<2x2x20xf32, #tpu.memory_space<vmem>>, vector<1x2x20xf32>
    %16 = vector.shape_cast %15 : vector<1x2x20xf32> to vector<2x20xf32>
    %17 = vector.shape_cast %14 : vector<2x20xf32> to vector<1x2x20xf32>
    tpu.vector_store %arg6[%c0_12, %c0_13, %c0_14], %17 {strides = array<i32>} : memref<2x2x20xf32, #tpu.memory_space<vmem>>, vector<1x2x20xf32>,
    %c1 = arith.constant 1 : index
    %c0_15 = arith.constant 0 : index
    %c0_16 = arith.constant 0 : index
    %18 = vector.load %arg1[%c1, %c0_15, %c0_16] : memref<2x32x20xf32, #tpu.memory_space<vmem>>, vector<1x32x20xf32>
    %19 = vector.shape_cast %18 : vector<1x32x20xf32> to vector<32x20xf32>
    %cst_17 = arith.constant dense<0.000000e+00> : vector<32x20xf32>
    %20 = tpu.matmul %0, %19, %cst_17 {dimension_numbers = #tpu.dot_dimension_numbers<[1], [0], [0], [1], [0, 0, 1, 1], [], []>} : vector<32x32xf32>, vector<32x20xf32>, vector<32x20xf32> -> vector<32x20xf32>
    %21 = vector.broadcast %1 : vector<32x1xf32> to vector<32x20xf32>
    %22 = arith.addf %20, %21 : vector<32x20xf32>
    %cst_18 = arith.constant 0.000000e+00 : f32
    %23 = vector.broadcast %cst_18 : f32 to vector<32x20xf32>
    %24 = arith.maximumf %22, %23 : vector<32x20xf32>
    %cst_19 = arith.constant dense<0.000000e+00> : vector<2x20xf32>
    %25 = tpu.matmul %2, %24, %cst_19 {dimension_numbers = #tpu.dot_dimension_numbers<[1], [0], [0], [1], [0, 0, 1, 1], [], []>} : vector<2x32xf32>, vector<32x20xf32>, vector<2x20xf32> -> vector<2x20xf32>
    %26 = vector.broadcast %3 : vector<2x1xf32> to vector<2x20xf32>
    %27 = arith.addf %25, %26 : vector<2x20xf32>
    %28 = math.tanh %27 : vector<2x20xf32>
    %c1_20 = arith.constant 1 : index
    %c0_21 = arith.constant 0 : index
    %c0_22 = arith.constant 0 : index
    %29 = vector.load %arg6[%c1_20, %c0_21, %c0_22] : memref<2x2x20xf32, #tpu.memory_space<vmem>>, vector<1x2x20xf32>
    %30 = vector.shape_cast %29 : vector<1x2x20xf32> to vector<2x20xf32>
    %31 = vector.shape_cast %28 : vector<2x20xf32> to vector<1x2x20xf32>
    tpu.vector_store %arg6[%c1_20, %c0_21, %c0_22], %31 {strides = array<i32>} : memref<2x2x20xf32, #tpu.memory_space<vmem>>, vector<1x2x20xf32>,
    return
  }
  func.func @transform_0(%arg0: i32) -> (i32, i32, i32) {
    %c0_i32 = arith.constant 0 : i32
    %c0_i32_0 = arith.constant 0 : i32
    %c0_i32_1 = arith.constant 0 : i32
    return %arg0, %c0_i32, %c0_i32_0 : i32, i32, i32
  }
  func.func @transform_1(%arg0: i32) -> (i32, i32) {
    %c0_i32 = arith.constant 0 : i32
    %c0_i32_0 = arith.constant 0 : i32
    %c0_i32_1 = arith.constant 0 : i32
    return %c0_i32, %c0_i32_0 : i32, i32
  }
  func.func @transform_2(%arg0: i32) -> (i32, i32) {
    %c0_i32 = arith.constant 0 : i32
    %c0_i32_0 = arith.constant 0 : i32
    %c0_i32_1 = arith.constant 0 : i32
    return %c0_i32, %c0_i32_0 : i32, i32
  }
  func.func @transform_3(%arg0: i32) -> (i32, i32) {
    %c0_i32 = arith.constant 0 : i32
    %c0_i32_0 = arith.constant 0 : i32
    %c0_i32_1 = arith.constant 0 : i32
    return %c0_i32, %c0_i32_0 : i32, i32
  }
  func.func @transform_4(%arg0: i32) -> (i32, i32) {
    %c0_i32 = arith.constant 0 : i32
    %c0_i32_0 = arith.constant 0 : i32
    %c0_i32_1 = arith.constant 0 : i32
    return %c0_i32, %c0_i32_0 : i32, i32
  }
  func.func @transform_5(%arg0: i32) -> (i32, i32, i32) {
    %c0_i32 = arith.constant 0 : i32
    %c0_i32_0 = arith.constant 0 : i32
    %c0_i32_1 = arith.constant 0 : i32
    return %arg0, %c0_i32, %c0_i32_0 : i32, i32, i32
  }
}

</mosaic_0001>

<llo_original>
// kernel: tpu_custom_call.1
$region0: #{tpu_custom_call.1}
  #allocation0 [shape = 'u32[]', space=smem, size = 0x4, offset = 0x4, fixed_abs, tag = 'smem constant byte address 0x4 - core index']
  #allocation1 [shape = 'u32[72,128]{1,0:T(1,128)}', space=vmem, size = 0x9000, scoped, tag = 'internal scratch']
  %s0 = inlined_call_operand.vmem [shape: f32[2,32,20], index: 0, kind: input, shape index: {}]
  %s1 = inlined_call_operand.vmem [shape: f32[32,32], index: 1, kind: input, shape index: {}]
  %s2 = inlined_call_operand.vmem [shape: f32[32,1], index: 2, kind: input, shape index: {}]
  %s3 = inlined_call_operand.vmem [shape: f32[2,32], index: 3, kind: input, shape index: {}]
  %s4 = inlined_call_operand.vmem [shape: f32[2,1], index: 4, kind: input, shape index: {}]
  %s5 = inlined_call_operand.hbm [shape: f32[2,2,20], index: 5, kind: output, shape index: {}]
  %s6 = sld [smem:[#allocation0]]
  $region30: #{tpu_custom_call.1} parent=0
    _
  %s8 = ssub.s32 1, %s6
  %s9 = scalar_select 0, %s8, %s6
  $region1: #{tpu_custom_call.1} parent=0
    #allocation2 [shape = 'u8[2048]{0}', space=vmem, size = 0x800, scoped, tag = 'output window, operand 0, single buffered']
    #allocation3 [shape = 's32[1]{0}', space=sflag, size = 0x4, scoped, tag = 'scoped memory for tpu_custom_call.1']
    %10 = vsyncpa [#allocation3], 0
    // Predicated region
    $region2: #{tpu_custom_call.1} parent=1 // pred_check
      _
    $region3: #{tpu_custom_call.1} parent=1 // pred_check_branch
      %12 = sbr.rel (0) target = $region5
    $region4: #{tpu_custom_call.1} parent=1 // pred_region
      _
    $region5: #{tpu_custom_call.1} parent=1 // pred_fallthru
      _
    // Predicated region
    $region6: #{tpu_custom_call.1} parent=1 // pred_check
      _
    $region7: #{tpu_custom_call.1} parent=1 // pred_check_branch
      %14 = sbr.rel (0) target = $region9
    $region8: #{tpu_custom_call.1} parent=1 // pred_region
      _
    $region9: #{tpu_custom_call.1} parent=1 // pred_fallthru
      _
    // Predicated region
    $region10: #{tpu_custom_call.1} parent=1 // pred_check
      _
    $region11: #{tpu_custom_call.1} parent=1 // pred_check_branch
      %16 = sbr.rel (0) target = $region13
    $region12: #{tpu_custom_call.1} parent=1 // pred_region
      _
    $region13: #{tpu_custom_call.1} parent=1 // pred_fallthru
      _
    // Predicated region
    $region14: #{tpu_custom_call.1} parent=1 // pred_check
      _
    $region15: #{tpu_custom_call.1} parent=1 // pred_check_branch
      %18 = sbr.rel (0) target = $region17
    $region16: #{tpu_custom_call.1} parent=1 // pred_region
      _
    $region17: #{tpu_custom_call.1} parent=1 // pred_fallthru
      _
    // Predicated region
    $region18: #{tpu_custom_call.1} parent=1 // pred_check
      _
    $region19: #{tpu_custom_call.1} parent=1 // pred_check_branch
      %20 = sbr.rel (0) target = $region21
    $region20: #{tpu_custom_call.1} parent=1 // pred_region
      _
    $region21: #{tpu_custom_call.1} parent=1 // pred_fallthru
      _
    %v21 = vld [vmem:[%s1] sm:$0xff]
    %v22 = vld [vmem:[%s1 + $0x8] sm:$0xff]
    %v23 = vld [vmem:[%s1 + $0x10] sm:$0xff]
    %v24 = vld [vmem:[%s1 + $0x18] sm:$0xff]
    %v25 = vld [vmem:[%s2] sm:$0xff]
    %v26 = vld [vmem:[%s2 + $0x8] sm:$0xff]
    %v27 = vld [vmem:[%s2 + $0x10] sm:$0xff]
    %v28 = vld [vmem:[%s2 + $0x18] sm:$0xff]
    %v29 = vld [vmem:[%s3] sm:$0x3]
    %v30 = vld [vmem:[%s4] sm:$0x3]
    %v31 = vld [vmem:[%s0] sm:$0xff]
    %v32 = vld [vmem:[%s0 + $0x8] sm:$0xff]
    %v33 = vld [vmem:[%s0 + $0x10] sm:$0xff]
    %v34 = vld [vmem:[%s0 + $0x18] sm:$0xff]
    %36 = vset.pattern.permute.xlu0 0
    %37 = vperm.xlu0 %36, %v25
    %v38 = vpop.permute.xlu0 %37
    %41 = vset.pattern.permute.xlu0 0
    %42 = vperm.xlu0 %41, %v26
    %v43 = vpop.permute.xlu0 %42
    %46 = vset.pattern.permute.xlu0 0
    %47 = vperm.xlu0 %46, %v27
    %v48 = vpop.permute.xlu0 %47
    %51 = vset.pattern.permute.xlu0 0
    %52 = vperm.xlu0 %51, %v28
    %v53 = vpop.permute.xlu0 %52
    %vm55 = vcmask 261120
    %v57 = vsel %vm55, %v21, 0
    %v60 = vsel %vm55, %v22, 0
    %v63 = vsel %vm55, %v23, 0
    %v66 = vsel %vm55, %v24, 0
    %68 = vmatpush.msra.mxu0 0.0
    %69 = vmatpush.msra.mxu0 0.0
    %70 = vmatpush.msra.mxu0 0.0
    %71 = vmatpush.msra.mxu0 0.0
    %72 = vmatpush.msra.mxu0 0.0
    %73 = vmatpush.msra.mxu0 0.0
    %74 = vmatpush.msra.mxu0 0.0
    %75 = vmatpush.msra.mxu0 0.0
    %76 = vmatpush.msra.mxu0 0.0
    %77 = vmatpush.msra.mxu0 0.0
    %78 = vmatpush.msra.mxu0 0.0
    %79 = vmatpush.msra.mxu0 0.0
    %80 = vmatpush.msra.mxu0 %v34
    %81 = vmatpush.msra.mxu0 %v33
    %82 = vmatpush.msra.mxu0 %v32
    %83 = vmatpush.msra.mxu0 %v31
    %84 = vmatmul.f32.gmra.mxu0 %v57
    %v85 = vpop.f32.mrf.mxu0
    %v86 = vadd.f32 %v38, %v85
    %87 = vmatmul.f32.gmra.mxu0 %v60
    %v88 = vpop.f32.mrf.mxu0
    %v89 = vadd.f32 %v43, %v88
    %90 = vmatmul.f32.gmra.mxu0 %v63
    %v91 = vpop.f32.mrf.mxu0
    %v92 = vadd.f32 %v48, %v91
    %93 = vmatmul.f32.gmra.mxu0 %v66
    %v94 = vpop.f32.mrf.mxu0
    %v95 = vadd.f32 %v53, %v94
    %96 = vdwg.mxu0
    %v97 = vmax.f32 %v86, 0.0
    %v98 = vmax.f32 %v89, 0.0
    %v99 = vmax.f32 %v92, 0.0
    %v100 = vmax.f32 %v95, 0.0
    %102 = vset.pattern.permute.xlu0 0
    %103 = vperm.xlu0 %102, %v30
    %v104 = vpop.permute.xlu0 %103
    %v107 = vsel %vm55, %v29, 0
    %109 = vmatpush.msra.mxu0 0.0
    %110 = vmatpush.msra.mxu0 0.0
    %111 = vmatpush.msra.mxu0 0.0
    %112 = vmatpush.msra.mxu0 0.0
    %113 = vmatpush.msra.mxu0 0.0
    %114 = vmatpush.msra.mxu0 0.0
    %115 = vmatpush.msra.mxu0 0.0
    %116 = vmatpush.msra.mxu0 0.0
    %117 = vmatpush.msra.mxu0 0.0
    %118 = vmatpush.msra.mxu0 0.0
    %119 = vmatpush.msra.mxu0 0.0
    %120 = vmatpush.msra.mxu0 0.0
    %121 = vmatpush.msra.mxu0 %v100
    %122 = vmatpush.msra.mxu0 %v99
    %123 = vmatpush.msra.mxu0 %v98
    %124 = vmatpush.msra.mxu0 %v97
    %125 = vmatmul.f32.gmra.mxu0 %v107
    %v126 = vpop.f32.mrf.mxu0
    %v127 = vadd.f32 %v104, %v126
    %128 = vdwg.mxu0
    %v129 = vtanh.pop %v127
    %vm130 = vcmask 156672
    %131 = vst.msk [vmem:[#allocation2] sm:$0x3] %vm130, %v129
    %s132 = scalar_lea.vmem %s0, 32
    %v133 = vld [vmem:[%s132] sm:$0xff]
    %v134 = vld [vmem:[%s132 + $0x8] sm:$0xff]
    %v135 = vld [vmem:[%s132 + $0x10] sm:$0xff]
    %v136 = vld [vmem:[%s132 + $0x18] sm:$0xff]
    %137 = vmatpush.msra.mxu0 0.0
    %138 = vmatpush.msra.mxu0 0.0
    %139 = vmatpush.msra.mxu0 0.0
    %140 = vmatpush.msra.mxu0 0.0
    %141 = vmatpush.msra.mxu0 0.0
    %142 = vmatpush.msra.mxu0 0.0
    %143 = vmatpush.msra.mxu0 0.0
    %144 = vmatpush.msra.mxu0 0.0
    %145 = vmatpush.msra.mxu0 0.0
    %146 = vmatpush.msra.mxu0 0.0
    %147 = vmatpush.msra.mxu0 0.0
    %148 = vmatpush.msra.mxu0 0.0
    %149 = vmatpush.msra.mxu0 %v136
    %150 = vmatpush.msra.mxu0 %v135
    %151 = vmatpush.msra.mxu0 %v134
    %152 = vmatpush.msra.mxu0 %v133
    %153 = vmatmul.f32.gmra.mxu0 %v57
    %v154 = vpop.f32.mrf.mxu0
    %v155 = vadd.f32 %v38, %v154
    %156 = vmatmul.f32.gmra.mxu0 %v60
    %v157 = vpop.f32.mrf.mxu0
    %v158 = vadd.f32 %v43, %v157
    %159 = vmatmul.f32.gmra.mxu0 %v63
    %v160 = vpop.f32.mrf.mxu0
    %v161 = vadd.f32 %v48, %v160
    %162 = vmatmul.f32.gmra.mxu0 %v66
    %v163 = vpop.f32.mrf.mxu0
    %v164 = vadd.f32 %v53, %v163
    %165 = vdwg.mxu0
    %v166 = vmax.f32 %v155, 0.0
    %v167 = vmax.f32 %v158, 0.0
    %v168 = vmax.f32 %v161, 0.0
    %v169 = vmax.f32 %v164, 0.0
    %170 = vmatpush.msra.mxu0 0.0
    %171 = vmatpush.msra.mxu0 0.0
    %172 = vmatpush.msra.mxu0 0.0
    %173 = vmatpush.msra.mxu0 0.0
    %174 = vmatpush.msra.mxu0 0.0
    %175 = vmatpush.msra.mxu0 0.0
    %176 = vmatpush.msra.mxu0 0.0
    %177 = vmatpush.msra.mxu0 0.0
    %178 = vmatpush.msra.mxu0 0.0
    %179 = vmatpush.msra.mxu0 0.0
    %180 = vmatpush.msra.mxu0 0.0
    %181 = vmatpush.msra.mxu0 0.0
    %182 = vmatpush.msra.mxu0 %v169
    %183 = vmatpush.msra.mxu0 %v168
    %184 = vmatpush.msra.mxu0 %v167
    %185 = vmatpush.msra.mxu0 %v166
    %186 = vmatmul.f32.gmra.mxu0 %v107
    %v187 = vpop.f32.mrf.mxu0
    %v188 = vadd.f32 %v104, %v187
    %189 = vdwg.mxu0
    %v190 = vtanh.pop %v188
    %s191 = scalar_lea.vmem [#allocation2], 2
    %192 = vst.msk [vmem:[%s191] sm:$0x3] %vm130, %v190
    // Predicated region
    $region22: #{tpu_custom_call.1} parent=1 // pred_check
      _
    $region23: #{tpu_custom_call.1} parent=1 // pred_check_branch
      %194 = sbr.rel (0) target = $region25
    $region24: #{tpu_custom_call.1} parent=1 // pred_region
      %196 = vsyncadd [#allocation3], 0
      %s197 = sshll.u32 [#allocation2], 4
      %s198 = int_to_ptr.vmem [resolvable:$true] %s197
      %s199 = sshll.u32 %s5, 4
      %s200 = int_to_ptr.hbm [resolvable:$true] %s199
      %205 = dma.vmem_to_hbm [thread:$0]  %s198, 64, %s200, [#allocation3], 32, 32, 2
    $region25: #{tpu_custom_call.1} parent=1 // pred_fallthru
      _
    // Predicated region
    $region26: #{tpu_custom_call.1} parent=1 // pred_check
      _
    $region27: #{tpu_custom_call.1} parent=1 // pred_check_branch
      %207 = sbr.rel (0) target = $region29
    $region28: #{tpu_custom_call.1} parent=1 // pred_region
      %209 = dma.done [#allocation3], 64
    $region29: #{tpu_custom_call.1} parent=1 // pred_fallthru
      _
    %210 = vsyncpa [#allocation3], 1

</llo_original>
